<compile_context>
chip_gen: v6e
topology: v6e:2x2x1
jax: 0.10.0
libtpu: 0.0.40
codegen_flags: <defaults>
</compile_context>

<pallas_src>
import math
import functools

import jax
import jax.numpy as jnp
from jax.experimental import pallas as pl
from jax.experimental.pallas import tpu as pltpu


# ----------------------------- Pallas kernel --------------------------------

def _fused_conv_kernel(x_ref, w_ref, b_ref, o_ref, xk_ref, *, cin, tl,
                       tap_offsets, multi_tile):
    """Fused conv as one K = Cin*kh*kw matmul.

    x_ref : (1, Cin, P)   bf16  flattened zero-padded image (resident per batch)
    w_ref : (Nout, K)     bf16  flattened weights, K ordered tap-major/chan-minor
    b_ref : (Nout, 1)     f32   bias column
    o_ref : (1, Nout, tl) bf16  lane-dense output tile (pixels on lanes)
    xk_ref: (K, tl)       bf16  VMEM scratch: sublane-stacked shifted slices
    """
    if multi_tile:
        base = pl.multiple_of(pl.program_id(1) * tl, 128)
    else:
        base = 0

    # Stack the kh*kw shifted input slices along the K (sublane) axis.
    # Loads go straight from x_ref so Mosaic can schedule them under the MXU.
    for t, off in enumerate(tap_offsets):                      # static unroll
        xk_ref[pl.ds(t * cin, cin), :] = x_ref[0, :, pl.ds(base + off, tl)]

    # Single MXU matmul, f32 accumulation; bias add in f32; store bf16.
    acc = jnp.dot(w_ref[...], xk_ref[...], preferred_element_type=jnp.float32)
    o_ref[0] = (acc + b_ref[...]).astype(o_ref.dtype)


# ------------------------------ Forward pass ---------------------------------

def _pixel_shuffle(x, r):
    """x: (N, C*r*r, H, W) -> (N, C, H*r, W*r), PyTorch pixel_shuffle semantics."""
    N, Cr2, H, W = x.shape
    C = Cr2 // (r * r)
    x = x.reshape(N, C, r, r, H, W)
    x = x.transpose(0, 1, 4, 2, 5, 3)
    return x.reshape(N, C, H * r, W * r)


def upsample_conv2d_forward(x, weight, bias, *, stride, padding, dilation,
                            scale_factor):
    N, Cin, H, W = x.shape
    nout, cin_w, kh, kw = weight.shape
    assert cin_w == Cin
    sh, sw = stride
    ph, pw = padding
    dh, dw = dilation

    Hp, Wp = H + 2 * ph, W + 2 * pw
    # Row-align wide images: pad each row to a multiple of 128 so the
    # i*dh*Wrow component of every tap offset is lane-aligned.  Skip for
    # narrow rows where the zero padding would dominate HBM reads.
    Wrow = ((Wp + 127) // 128) * 128 if Wp >= 96 else Wp

    Ho1, Wo1 = Hp - dh * (kh - 1), Wp - dw * (kw - 1)    # stride-1 conv extents
    Ho = (Ho1 - 1) // sh + 1                              # strided conv extents
    Wo = (Wo1 - 1) // sw + 1
    del Ho, Wo  # (shapes implied by the slicing below)

    # Flattened "extended" output: Ho1 rows of Wrow columns (cols >= Wo1 junk).
    L = Ho1 * Wrow
    max_off = dh * (kh - 1) * Wrow + dw * (kw - 1)        # largest tap shift

    TL_MAX = 512                     # modest lane extent -> low vreg pressure
    need_split = N < 2               # v7x: keep both TensorCores busy
    if L <= TL_MAX and not need_split:
        tl, multi = L, False
    else:
        tl = TL_MAX if L > TL_MAX else max(128, ((L + 255) // 256) * 128)
        multi = True
    L_pad = ((L + tl - 1) // tl) * tl if multi else L
    n_l = L_pad // tl
    P = max_off + L_pad                                   # padded flat length

    # Cast to bf16 BEFORE padding so the materialized padded copy is half-size.
    xb = x.astype(jnp.bfloat16)
    xp = jnp.pad(xb, ((0, 0), (0, 0), (ph, ph), (pw, pw + (Wrow - Wp))))
    xf = xp.reshape(N, Cin, Hp * Wrow)
    if P != Hp * Wrow:
        xf = jnp.pad(xf, ((0, 0), (0, 0), (0, P - Hp * Wrow)))

    # Flattened weights: (Nout, Cin, kh, kw) -> (Nout, kh, kw, Cin) -> (Nout, K)
    # so K index = (i*kw + j)*Cin + c matches the in-kernel stacking order.
    K = Cin * kh * kw
    w_flat = jnp.transpose(weight, (0, 2, 3, 1)).reshape(nout, K)
    w_flat = w_flat.astype(jnp.bfloat16)
    b2d = bias.reshape(nout, 1).astype(jnp.float32)

    tap_offsets = tuple(i * dh * Wrow + j * dw
                        for i in range(kh) for j in range(kw))

    kernel = functools.partial(_fused_conv_kernel, cin=Cin, tl=tl,
                               tap_offsets=tap_offsets, multi_tile=multi)

    ext = pl.pallas_call(
        kernel,
        out_shape=jax.ShapeDtypeStruct((N, nout, L_pad), jnp.bfloat16),
        grid_spec=pltpu.PrefetchScalarGridSpec(
            num_scalar_prefetch=0,
            grid=(N, n_l),
            in_specs=[
                # Whole flattened image per batch, resident across pixel tiles.
                pl.BlockSpec((1, Cin, P), lambda n, l: (n, 0, 0)),
                # Flattened weight slab, resident.
                pl.BlockSpec((nout, K), lambda n, l: (0, 0)),
                # Bias column, resident.
                pl.BlockSpec((nout, 1), lambda n, l: (0, 0)),
            ],
            out_specs=pl.BlockSpec((1, nout, tl), lambda n, l: (n, 0, l)),
            scratch_shapes=[pltpu.VMEM((K, tl), jnp.bfloat16)],
        ),
        compiler_params=pltpu.CompilerParams(
            dimension_semantics=("parallel", "parallel")),
    )(xf, w_flat, b2d)

    # Epilogue in bf16: valid-column trim + pixel_shuffle fuse into one
    # transpose pass over the bf16 conv output; cast back to input dtype at
    # the final write.
    conv = ext[:, :, :L].reshape(N, nout, Ho1, Wrow)[:, :, :, :Wo1]
    if (sh, sw) != (1, 1):
        conv = conv[:, :, ::sh, ::sw]   # TODO(synk): fuse striding into kernel

    return _pixel_shuffle(conv, scale_factor).astype(x.dtype)


# ------------------------------ Module wrapper --------------------------------

def _pair(v):
    return (v, v) if isinstance(v, int) else tuple(v)


class UpsampleConv2d:
    """JAX/Pallas port of encoding.nn.UpsampleConv2d (groups=1)."""

    def __init__(self, in_channels, out_channels, kernel_size, stride=1,
                 padding=0, dilation=1, groups=1, scale_factor=1, bias=True,
                 key=None):
        assert groups == 1, "only groups=1 supported"  # TODO(synk): grouped conv
        self.in_channels = in_channels
        self.out_channels = out_channels
        self.kernel_size = _pair(kernel_size)
        self.stride = _pair(stride)
        self.padding = _pair(padding)
        self.dilation = _pair(dilation)
        self.scale_factor = scale_factor

        kh, kw = self.kernel_size
        n = in_channels * kh * kw
        stdv = 1.0 / math.sqrt(n)
        key = jax.random.PRNGKey(0) if key is None else key
        kw_, kb_ = jax.random.split(key)
        # weight: (out_channels*scale^2, in_channels, kh, kw)  (PyTorch OIHW)
        self.weight = jax.random.uniform(
            kw_, (out_channels * scale_factor * scale_factor, in_channels, kh, kw),
            minval=-stdv, maxval=stdv, dtype=jnp.float32)
        if bias:
            self.bias = jax.random.uniform(
                kb_, (out_channels * scale_factor * scale_factor,),
                minval=-stdv, maxval=stdv, dtype=jnp.float32)
        else:
            # zero bias still added in-kernel (one cheap VPU add)
            self.bias = jnp.zeros((out_channels * scale_factor * scale_factor,),
                                  jnp.float32)

        self._forward = jax.jit(functools.partial(
            upsample_conv2d_forward,
            stride=self.stride, padding=self.padding,
            dilation=self.dilation, scale_factor=self.scale_factor))

    def __call__(self, x):
        return self._forward(x, self.weight, self.bias)


# --------------------------------- main ---------------------------------------

if __name__ == "__main__":
    key = jax.random.PRNGKey(0)
    kx, kp = jax.random.split(key)

    N, Cin, H, W = 2, 4, 16, 16
    Cout, ksize, stride, padding, scale = 8, 3, 1, 1, 2

    x = jax.random.normal(kx, (N, Cin, H, W), dtype=jnp.float32)

    mod = UpsampleConv2d(Cin, Cout, ksize, stride=stride, padding=padding,
                         scale_factor=scale, bias=True, key=kp)
    y = jax.block_until_ready(mod(x))

    # Reference check against XLA conv + pixel shuffle (f32).
    ref_conv = jax.lax.conv_general_dilated(
        x, mod.weight, window_strides=mod.stride,
        padding=[(padding, padding), (padding, padding)],
        rhs_dilation=mod.dilation,
        dimension_numbers=("NCHW", "OIHW", "NCHW"))
    ref = _pixel_shuffle(ref_conv + mod.bias.reshape(1, -1, 1, 1), scale)

    expected_shape = (N, Cout, H * scale, W * scale)
    assert y.shape == expected_shape, (y.shape, expected_shape)
    # bf16 inputs/weights with f32 accumulation -> bf16-level tolerance.
    assert jnp.allclose(y, ref, atol=5e-2, rtol=5e-2), float(jnp.abs(y - ref).max())

    print("KERNEL_OK")
</pallas_src>

<mosaic_0001>
module attributes {stable_mosaic.version = 11 : i64} {
  func.func @_fused_conv_kernel(%arg0: i32, %arg1: i32, %arg2: memref<1x4x326xbf16, #tpu.memory_space<vmem>>, %arg3: memref<32x36xbf16, #tpu.memory_space<vmem>>, %arg4: memref<32x1xf32, #tpu.memory_space<vmem>>, %arg5: memref<1x32x288xbf16, #tpu.memory_space<vmem>>, %arg6: memref<36x288xbf16, #tpu.memory_space<vmem>>) attributes {dimension_semantics = [#tpu.dimension_semantics<parallel>, #tpu.dimension_semantics<parallel>], iteration_bounds = array<i64: 2, 1>, scalar_prefetch = 0 : i64, scratch_operands = 1 : i64, tpu.core_type = #tpu.core_type<tc>, window_params = [{transform_indices = @transform_0, window_bounds = array<i64: 1, 4, 326>}, {pipeline_mode = #tpu.pipeline_mode<synchronous>, transform_indices = @transform_1, window_bounds = array<i64: 32, 36>}, {pipeline_mode = #tpu.pipeline_mode<synchronous>, transform_indices = @transform_2, window_bounds = array<i64: 32, 1>}, {transform_indices = @transform_3, window_bounds = array<i64: 1, 32, 288>}]} {
    %c0 = arith.constant 0 : index
    %c0_0 = arith.constant 0 : index
    %c0_1 = arith.constant 0 : index
    %0 = vector.load %arg2[%c0, %c0_0, %c0_1] : memref<1x4x326xbf16, #tpu.memory_space<vmem>>, vector<1x4x288xbf16>
    %1 = vector.shape_cast %0 : vector<1x4x288xbf16> to vector<4x288xbf16>
    %c0_2 = arith.constant 0 : index
    %c0_3 = arith.constant 0 : index
    %2 = vector.load %arg6[%c0_2, %c0_3] : memref<36x288xbf16, #tpu.memory_space<vmem>>, vector<4x288xbf16>
    tpu.vector_store %arg6[%c0_2, %c0_3], %1 {strides = array<i32>} : memref<36x288xbf16, #tpu.memory_space<vmem>>, vector<4x288xbf16>,
    %c0_4 = arith.constant 0 : index
    %c0_5 = arith.constant 0 : index
    %c1 = arith.constant 1 : index
    %3 = vector.load %arg2[%c0_4, %c0_5, %c1] : memref<1x4x326xbf16, #tpu.memory_space<vmem>>, vector<1x4x288xbf16>
    %4 = vector.shape_cast %3 : vector<1x4x288xbf16> to vector<4x288xbf16>
    %c4 = arith.constant 4 : index
    %c0_6 = arith.constant 0 : index
    %5 = vector.load %arg6[%c4, %c0_6] : memref<36x288xbf16, #tpu.memory_space<vmem>>, vector<4x288xbf16>
    tpu.vector_store %arg6[%c4, %c0_6], %4 {strides = array<i32>} : memref<36x288xbf16, #tpu.memory_space<vmem>>, vector<4x288xbf16>,
    %c0_7 = arith.constant 0 : index
    %c0_8 = arith.constant 0 : index
    %c2 = arith.constant 2 : index
    %6 = vector.load %arg2[%c0_7, %c0_8, %c2] : memref<1x4x326xbf16, #tpu.memory_space<vmem>>, vector<1x4x288xbf16>
    %7 = vector.shape_cast %6 : vector<1x4x288xbf16> to vector<4x288xbf16>
    %c8 = arith.constant 8 : index
    %c0_9 = arith.constant 0 : index
    %8 = vector.load %arg6[%c8, %c0_9] : memref<36x288xbf16, #tpu.memory_space<vmem>>, vector<4x288xbf16>
    tpu.vector_store %arg6[%c8, %c0_9], %7 {strides = array<i32>} : memref<36x288xbf16, #tpu.memory_space<vmem>>, vector<4x288xbf16>,
    %c0_10 = arith.constant 0 : index
    %c0_11 = arith.constant 0 : index
    %c18 = arith.constant 18 : index
    %9 = vector.load %arg2[%c0_10, %c0_11, %c18] : memref<1x4x326xbf16, #tpu.memory_space<vmem>>, vector<1x4x288xbf16>
    %10 = vector.shape_cast %9 : vector<1x4x288xbf16> to vector<4x288xbf16>
    %c12 = arith.constant 12 : index
    %c0_12 = arith.constant 0 : index
    %11 = vector.load %arg6[%c12, %c0_12] : memref<36x288xbf16, #tpu.memory_space<vmem>>, vector<4x288xbf16>
    tpu.vector_store %arg6[%c12, %c0_12], %10 {strides = array<i32>} : memref<36x288xbf16, #tpu.memory_space<vmem>>, vector<4x288xbf16>,
    %c0_13 = arith.constant 0 : index
    %c0_14 = arith.constant 0 : index
    %c19 = arith.constant 19 : index
    %12 = vector.load %arg2[%c0_13, %c0_14, %c19] : memref<1x4x326xbf16, #tpu.memory_space<vmem>>, vector<1x4x288xbf16>
    %13 = vector.shape_cast %12 : vector<1x4x288xbf16> to vector<4x288xbf16>
    %c16 = arith.constant 16 : index
    %c0_15 = arith.constant 0 : index
    %14 = vector.load %arg6[%c16, %c0_15] : memref<36x288xbf16, #tpu.memory_space<vmem>>, vector<4x288xbf16>
    tpu.vector_store %arg6[%c16, %c0_15], %13 {strides = array<i32>} : memref<36x288xbf16, #tpu.memory_space<vmem>>, vector<4x288xbf16>,
    %c0_16 = arith.constant 0 : index
    %c0_17 = arith.constant 0 : index
    %c20 = arith.constant 20 : index
    %15 = vector.load %arg2[%c0_16, %c0_17, %c20] : memref<1x4x326xbf16, #tpu.memory_space<vmem>>, vector<1x4x288xbf16>
    %16 = vector.shape_cast %15 : vector<1x4x288xbf16> to vector<4x288xbf16>
    %c20_18 = arith.constant 20 : index
    %c0_19 = arith.constant 0 : index
    %17 = vector.load %arg6[%c20_18, %c0_19] : memref<36x288xbf16, #tpu.memory_space<vmem>>, vector<4x288xbf16>
    tpu.vector_store %arg6[%c20_18, %c0_19], %16 {strides = array<i32>} : memref<36x288xbf16, #tpu.memory_space<vmem>>, vector<4x288xbf16>,
    %c0_20 = arith.constant 0 : index
    %c0_21 = arith.constant 0 : index
    %c36 = arith.constant 36 : index
    %18 = vector.load %arg2[%c0_20, %c0_21, %c36] : memref<1x4x326xbf16, #tpu.memory_space<vmem>>, vector<1x4x288xbf16>
    %19 = vector.shape_cast %18 : vector<1x4x288xbf16> to vector<4x288xbf16>
    %c24 = arith.constant 24 : index
    %c0_22 = arith.constant 0 : index
    %20 = vector.load %arg6[%c24, %c0_22] : memref<36x288xbf16, #tpu.memory_space<vmem>>, vector<4x288xbf16>
    tpu.vector_store %arg6[%c24, %c0_22], %19 {strides = array<i32>} : memref<36x288xbf16, #tpu.memory_space<vmem>>, vector<4x288xbf16>,
    %c0_23 = arith.constant 0 : index
    %c0_24 = arith.constant 0 : index
    %c37 = arith.constant 37 : index
    %21 = vector.load %arg2[%c0_23, %c0_24, %c37] : memref<1x4x326xbf16, #tpu.memory_space<vmem>>, vector<1x4x288xbf16>
    %22 = vector.shape_cast %21 : vector<1x4x288xbf16> to vector<4x288xbf16>
    %c28 = arith.constant 28 : index
    %c0_25 = arith.constant 0 : index
    %23 = vector.load %arg6[%c28, %c0_25] : memref<36x288xbf16, #tpu.memory_space<vmem>>, vector<4x288xbf16>
    tpu.vector_store %arg6[%c28, %c0_25], %22 {strides = array<i32>} : memref<36x288xbf16, #tpu.memory_space<vmem>>, vector<4x288xbf16>,
    %c0_26 = arith.constant 0 : index
    %c0_27 = arith.constant 0 : index
    %c38 = arith.constant 38 : index
    %24 = vector.load %arg2[%c0_26, %c0_27, %c38] : memref<1x4x326xbf16, #tpu.memory_space<vmem>>, vector<1x4x288xbf16>
    %25 = vector.shape_cast %24 : vector<1x4x288xbf16> to vector<4x288xbf16>
    %c32 = arith.constant 32 : index
    %c0_28 = arith.constant 0 : index
    %26 = vector.load %arg6[%c32, %c0_28] : memref<36x288xbf16, #tpu.memory_space<vmem>>, vector<4x288xbf16>
    tpu.vector_store %arg6[%c32, %c0_28], %25 {strides = array<i32>} : memref<36x288xbf16, #tpu.memory_space<vmem>>, vector<4x288xbf16>,
    %c0_29 = arith.constant 0 : index
    %c0_30 = arith.constant 0 : index
    %27 = vector.load %arg3[%c0_29, %c0_30] : memref<32x36xbf16, #tpu.memory_space<vmem>>, vector<32x36xbf16>
    %c0_31 = arith.constant 0 : index
    %c0_32 = arith.constant 0 : index
    %28 = vector.load %arg6[%c0_31, %c0_32] : memref<36x288xbf16, #tpu.memory_space<vmem>>, vector<36x288xbf16>
    %cst = arith.constant dense<0.000000e+00> : vector<32x288xf32>
    %29 = tpu.matmul %27, %28, %cst {dimension_numbers = #tpu.dot_dimension_numbers<[1], [0], [0], [1], [0, 0, 1, 1], [], []>} : vector<32x36xbf16>, vector<36x288xbf16>, vector<32x288xf32> -> vector<32x288xf32>
    %c0_33 = arith.constant 0 : index
    %c0_34 = arith.constant 0 : index
    %30 = vector.load %arg4[%c0_33, %c0_34] : memref<32x1xf32, #tpu.memory_space<vmem>>, vector<32x1xf32>
    %31 = vector.broadcast %30 : vector<32x1xf32> to vector<32x288xf32>
    %32 = arith.addf %29, %31 : vector<32x288xf32>
    %33 = arith.truncf %32 : vector<32x288xf32> to vector<32x288xbf16>
    %c0_35 = arith.constant 0 : index
    %c0_36 = arith.constant 0 : index
    %c0_37 = arith.constant 0 : index
    %34 = vector.load %arg5[%c0_35, %c0_36, %c0_37] : memref<1x32x288xbf16, #tpu.memory_space<vmem>>, vector<1x32x288xbf16>
    %35 = vector.shape_cast %34 : vector<1x32x288xbf16> to vector<32x288xbf16>
    %36 = vector.shape_cast %33 : vector<32x288xbf16> to vector<1x32x288xbf16>
    tpu.vector_store %arg5[%c0_35, %c0_36, %c0_37], %36 {strides = array<i32>} : memref<1x32x288xbf16, #tpu.memory_space<vmem>>, vector<1x32x288xbf16>,
    return
  }
  func.func @transform_0(%arg0: i32, %arg1: i32) -> (i32, i32, i32) {
    %c0_i32 = arith.constant 0 : i32
    %c0_i32_0 = arith.constant 0 : i32
    %c0_i32_1 = arith.constant 0 : i32
    return %arg0, %c0_i32, %c0_i32_0 : i32, i32, i32
  }
  func.func @transform_1(%arg0: i32, %arg1: i32) -> (i32, i32) {
    %c0_i32 = arith.constant 0 : i32
    %c0_i32_0 = arith.constant 0 : i32
    %c0_i32_1 = arith.constant 0 : i32
    return %c0_i32, %c0_i32_0 : i32, i32
  }
  func.func @transform_2(%arg0: i32, %arg1: i32) -> (i32, i32) {
    %c0_i32 = arith.constant 0 : i32
    %c0_i32_0 = arith.constant 0 : i32
    %c0_i32_1 = arith.constant 0 : i32
    return %c0_i32, %c0_i32_0 : i32, i32
  }
  func.func @transform_3(%arg0: i32, %arg1: i32) -> (i32, i32, i32) {
    %c0_i32 = arith.constant 0 : i32
    %c0_i32_0 = arith.constant 0 : i32
    return %arg0, %c0_i32, %arg1 : i32, i32, i32
  }
}

</mosaic_0001>

<llo_original>
// kernel: upsample_conv2d_forward.1
$region0: #{upsample_conv2d_forward.1}
  #allocation0 [shape = 'u32[]', space=smem, size = 0x4, offset = 0x4, fixed_abs, tag = 'smem constant byte address 0x4 - core index']
  #allocation1 [shape = 'u32[144,128]{1,0:T(1,128)}', space=vmem, size = 0x12000, scoped, tag = 'internal scratch']
  #allocation2 [shape = 'bf16[36,288]{1,0:T(8,128)(2,1)}', space=vmem, size = 0x7800, scoped, tag = 'scratch operand']
  %s0 = inlined_call_operand.vmem [shape: bf16[2,4,326], index: 0, kind: input, shape index: {}]
  %s1 = inlined_call_operand.vmem [shape: bf16[32,36], index: 1, kind: input, shape index: {}]
  %s2 = inlined_call_operand.vmem [shape: f32[32,1], index: 2, kind: input, shape index: {}]
  %s3 = inlined_call_operand.vmem [shape: bf16[2,32,288], index: 3, kind: output, shape index: {}]
  %s4 = sld [smem:[#allocation0]]
  $region45: #{upsample_conv2d_forward.1} parent=0
    _
  %s6 = ssub.s32 1, %s4
  %s7 = scalar_select 0, %s6, %s4
  loop: start=0, step=1, limit=4
  $region2: #{upsample_conv2d_forward.1} parent=0 // loop_pre_header
    _
  $region3: #{upsample_conv2d_forward.1} parent=0 // loop_header
    %s9 = sphi 0, %s13
    %p10 = scmp.ge.s32.totalorder %s9, 4
    %s16 = sphi 0, %s28
    %s17 = sphi 0, %s24
    %s18 = sphi 0, %s16
    %s19 = sphi 0, %s17
    %s20 = sphi 0, %s18
    %s21 = sphi 0, %s19
    %s31 = sphi 0, %s33
    %s34 = sphi 0, %s31
    %s35 = sphi 0, %s34
    %s51 = sphi 0, %s35
    %s55 = sphi 0, %s55
    %s57 = sphi 0, %s55
    %s58 = sphi 0, %s57
    %s72 = sphi 0, %s58
    %s76 = sphi 0, %s76
    %s78 = sphi 0, %s76
    %s79 = sphi 0, %s78
    %s93 = sphi 0, %s79
    %s101 = sphi 0, %s103
    %s104 = sphi 0, %s101
    %s105 = sphi 0, %s104
    %s121 = sphi 0, %s105
  $region4: #{upsample_conv2d_forward.1} parent=0 // loop_header_branch
    %12 = sbr.rel (%p10) target = $region8
  $region5: #{upsample_conv2d_forward.1} parent=0 // loop_body
    %s14 = ssub.s32 %s9, 1
    %s15 = ssub.s32 %s9, 2
    %s22 = sadd.s32 1, %s17
    %p23 = scmp.ge.s32.totalorder %s22, 1
    %s24 = scalar_select %p23, 0, %s22
    %s25 = sadd.s32 1, %s16
    %s26 = scalar_select %p23, %s25, %s16
    %p27 = scmp.ge.s32.totalorder %s26, 2
    %s28 = scalar_select %p27, 0, %s26
    %s29 = ssub.s32 %s16, %s28
    %p30 = scmp.eq.s32.totalorder %s29, 0
    %s32 = sadd.s32 %s31, 1
    %s33 = scalar_select %p30, %s31, %s32
    %p36 = pneg %p30
    %p37 = scmp.eq.s32.totalorder %s9, 1
    %p38 = por %p36, %p37
    %p39 = scmp.ne.s32.totalorder %s31, %s34
    %p40 = scmp.eq.s32.totalorder %s9, 0
    %p41 = por %p39, %p40
    %p42 = scmp.ne.s32.totalorder %s31, %s34
    %p43 = scmp.eq.s32.totalorder %s14, 1
    %p44 = por %p42, %p43
    %p45 = scmp.ne.s32.totalorder %s34, %s35
    %p46 = scmp.eq.s32.totalorder %s14, 0
    %p47 = por %p45, %p46
    %p48 = scmp.ne.s32.totalorder %s34, %s35
    %p49 = scmp.eq.s32.totalorder %s15, 1
    %p50 = por %p48, %p49
    %p52 = scmp.ne.s32.totalorder %s35, %s51
    %p53 = scmp.eq.s32.totalorder %s15, 0
    %p54 = por %p52, %p53
    %s56 = sadd.s32 %s55, 1
    %p59 = scmp.eq.s32.totalorder %s9, 1
    %p60 = scmp.ne.s32.totalorder %s55, %s57
    %p61 = scmp.eq.s32.totalorder %s9, 0
    %p62 = por %p60, %p61
    %p63 = scmp.ne.s32.totalorder %s55, %s57
    %p64 = scmp.eq.s32.totalorder %s14, 1
    %p65 = por %p63, %p64
    %p66 = scmp.ne.s32.totalorder %s57, %s58
    %p67 = scmp.eq.s32.totalorder %s14, 0
    %p68 = por %p66, %p67
    %p69 = scmp.ne.s32.totalorder %s57, %s58
    %p70 = scmp.eq.s32.totalorder %s15, 1
    %p71 = por %p69, %p70
    %p73 = scmp.ne.s32.totalorder %s58, %s72
    %p74 = scmp.eq.s32.totalorder %s15, 0
    %p75 = por %p73, %p74
    %s77 = sadd.s32 %s76, 1
    %p80 = scmp.eq.s32.totalorder %s9, 1
    %p81 = scmp.ne.s32.totalorder %s76, %s78
    %p82 = scmp.eq.s32.totalorder %s9, 0
    %p83 = por %p81, %p82
    %p84 = scmp.ne.s32.totalorder %s76, %s78
    %p85 = scmp.eq.s32.totalorder %s14, 1
    %p86 = por %p84, %p85
    %p87 = scmp.ne.s32.totalorder %s78, %s79
    %p88 = scmp.eq.s32.totalorder %s14, 0
    %p89 = por %p87, %p88
    %p90 = scmp.ne.s32.totalorder %s78, %s79
    %p91 = scmp.eq.s32.totalorder %s15, 1
    %p92 = por %p90, %p91
    %p94 = scmp.ne.s32.totalorder %s79, %s93
    %p95 = scmp.eq.s32.totalorder %s15, 0
    %p96 = por %p94, %p95
    %s97 = ssub.s32 %s16, %s28
    %s98 = ssub.s32 %s17, %s24
    %s99 = sor.u32 %s97, %s98
    %p100 = scmp.eq.s32.totalorder %s99, 0
    %s102 = sadd.s32 %s101, 1
    %s103 = scalar_select %p100, %s101, %s102
    %p106 = pneg %p100
    %p107 = scmp.eq.s32.totalorder %s9, 1
    %p108 = por %p106, %p107
    %p109 = scmp.ne.s32.totalorder %s101, %s104
    %p110 = scmp.eq.s32.totalorder %s9, 0
    %p111 = por %p109, %p110
    %p112 = scmp.ne.s32.totalorder %s101, %s104
    %p113 = scmp.eq.s32.totalorder %s14, 1
    %p114 = por %p112, %p113
    %p115 = scmp.ne.s32.totalorder %s104, %s105
    %p116 = scmp.eq.s32.totalorder %s14, 0
    %p117 = por %p115, %p116
    %p118 = scmp.ne.s32.totalorder %s104, %s105
    %p119 = scmp.eq.s32.totalorder %s15, 1
    %p120 = por %p118, %p119
    %p122 = scmp.ne.s32.totalorder %s105, %s121
    %p123 = scmp.eq.s32.totalorder %s15, 0
    %p124 = por %p122, %p123
    %p125 = scmp.le.s32.totalorder 1, %s9
    %p126 = scmp.lt.s32.totalorder %s9, 3
    %p127 = pnand %p125, %p126
    %p128 = pneg %p127
    // Predicated region
    $region9: #{upsample_conv2d_forward.1} parent=5 // pred_check
      _
    $region10: #{upsample_conv2d_forward.1} parent=5 // pred_check_branch
      %130 = sbr.rel (%p127) target = $region12
    $region11: #{upsample_conv2d_forward.1} parent=5 // pred_region
      %s131 = ssub.s32 %s9, 1
      // Predicated region
      $region13: #{upsample_conv2d_forward.1} parent=11 // pred_check
        %p132 = pneg %p68
      $region14: #{upsample_conv2d_forward.1} parent=11 // pred_check_branch
        %134 = sbr.rel (%p132) target = $region16
      $region15: #{upsample_conv2d_forward.1} parent=11 // pred_region
        _
      $region16: #{upsample_conv2d_forward.1} parent=11 // pred_fallthru
        _
      // Predicated region
      $region17: #{upsample_conv2d_forward.1} parent=11 // pred_check
        %p135 = pneg %p89
      $region18: #{upsample_conv2d_forward.1} parent=11 // pred_check_branch
        %137 = sbr.rel (%p135) target = $region20
      $region19: #{upsample_conv2d_forward.1} parent=11 // pred_region
        _
      $region20: #{upsample_conv2d_forward.1} parent=11 // pred_fallthru
        _
    $region12: #{upsample_conv2d_forward.1} parent=5 // pred_fallthru
      _
    %p138 = scmp.lt.s32.totalorder %s9, 2
    // Predicated region
    $region21: #{upsample_conv2d_forward.1} parent=5 // pred_check
      %p139 = pneg %p138
    $region22: #{upsample_conv2d_forward.1} parent=5 // pred_check_branch
      %141 = sbr.rel (%p139) target = $region24
    $region23: #{upsample_conv2d_forward.1} parent=5 // pred_region
      // Predicated region
      $region25: #{upsample_conv2d_forward.1} parent=23 // pred_check
        %p142 = pneg %p41
      $region26: #{upsample_conv2d_forward.1} parent=23 // pred_check_branch
        %144 = sbr.rel (%p142) target = $region28
      $region27: #{upsample_conv2d_forward.1} parent=23 // pred_region
        %p145 = scmp.lt.s32.totalorder %s16, 1
        %s146 = scalar_select %p145, %s16, 1
        %s147 = smul.addr %s146, 3
        %s148 = smul.addr %s147, 2
        %s149 = scalar_lea.vmem %s0, %s148
      $region28: #{upsample_conv2d_forward.1} parent=23 // pred_fallthru
        _
    $region24: #{upsample_conv2d_forward.1} parent=5 // pred_fallthru
      _
    %p150 = scmp.le.s32.totalorder 1, %s9
    %p151 = scmp.lt.s32.totalorder %s9, 3
    %p152 = pnand %p150, %p151
    %p153 = pneg %p152
    // Predicated region
    $region29: #{upsample_conv2d_forward.1} parent=5 // pred_check
      _
    $region30: #{upsample_conv2d_forward.1} parent=5 // pred_check_branch
      %155 = sbr.rel (%p152) target = $region32
    $region31: #{upsample_conv2d_forward.1} parent=5 // pred_region
      %s156 = ssub.s32 %s9, 1
      %p157 = scmp.lt.s32.totalorder %s18, 1
      %s158 = scalar_select %p157, %s18, 1
      %s159 = smul.addr %s158, 3
      %s160 = smul.addr %s159, 2
      %s161 = scalar_lea.vmem %s0, %s160
      %p162 = pneg %p47
      %p163 = pneg %p44
      %p164 = pneg %p68
      %p165 = pneg %p65
      %p166 = pneg %p89
      %p167 = pneg %p86
      %p168 = pneg %p117
      %p169 = pneg %p114
      %s170 = smul.u32 3, %s19
      %p171 = scmp.lt.s32.totalorder %s18, 1
      %s172 = scalar_select %p171, %s18, 1
      %p173 = scmp.lt.s32.totalorder %s170, 2
      %s174 = scalar_select %p173, %s170, 2
      %s175 = smul.addr %s172, 12
      %s176 = sadd.s32 %s174, %s175
      %s177 = smul.addr %s176, 4
      %s178 = scalar_lea.vmem %s3, %s177
      %p179 = scmp.lt.s32.totalorder %s18, 1
      %s180 = scalar_select %p179, %s18, 1
      %s181 = smul.addr %s180, 3
      %s182 = smul.addr %s181, 2
      %s183 = scalar_lea.vmem %s0, %s182
      %s184 = smul.u32 3, %s19
      %p185 = scmp.lt.s32.totalorder %s18, 1
      %s186 = scalar_select %p185, %s18, 1
      %p187 = scmp.lt.s32.totalorder %s184, 2
      %s188 = scalar_select %p187, %s184, 2
      %s189 = smul.addr %s186, 12
      %s190 = sadd.s32 %s188, %s189
      %s191 = smul.addr %s190, 4
      %s192 = scalar_lea.vmem %s3, %s191
      %s193 = smul.u32 3, %s19
      %v195 = vld [vmem:[%s183] sm:$0x3f]
      %v197 = vcombine.high %v195, %v195
      %v199 = vunpack.c.l.s4 1983009808
      %v200 = vunpack.c.0.s8 %v199
      %v201 = vlaneseq
      %v202 = vshrl.u32 %v201, 7
      %v203 = vsub.s32 %v200, %v202
      %v204 = vrot.slane %v195, %v203
      %v206 = vunpack.c.l.s4 1983009808
      %v207 = vunpack.c.0.s8 %v206
      %v208 = vlaneseq
      %v209 = vshrl.u32 %v208, 7
      %v210 = vsub.s32 %v207, %v209
      %v211 = vrot.slane %v197, %v210
      %214 = vst [vmem:[#allocation2] sm:$0x33] %v204
      %vm215 = vcmask 254976
      %216 = vst.msk [vmem:[#allocation2 + $0x8] sm:$0x3] %vm215, %v211
      %v217 = vld [vmem:[%s183] sm:$0x3f]
      %v219 = vcombine.low %v217, %v217
      %v221 = vunpack.c.l.s4 1983009808
      %v222 = vunpack.c.0.s8 %v221
      %v223 = vlaneseq
      %v224 = vshrl.u32 %v223, 7
      %v225 = vsub.s32 %v222, %v224
      %v226 = vrot.slane %v219, %v225
      %v228 = vunpack.c.l.s4 1983009808
      %v229 = vunpack.c.0.s8 %v228
      %v230 = vlaneseq
      %v231 = vshrl.u32 %v230, 7
      %v232 = vsub.s32 %v229, %v231
      %v233 = vrot.slane %v217, %v232
      %234 = vrot.lane.b32.xlu0 %v226, 127
      %v235 = vpop.permute.xlu0 %234
      %236 = vrot.lane.b32.xlu0 %v233, 127
      %v237 = vpop.permute.xlu0 %236
      %v238 = vrot.slane %v235, 4
      %v239 = vrot.slane %v237, 4
      %vm240 = vcmask 1043456
      %v241 = vsel %vm240, %v238, %v239
      %vm242 = vcmask 1039360
      %v243 = vsel %vm242, %v235, %v241
      %246 = vst [vmem:[#allocation2] sm:$0xcc] %v243
      %vm247 = vcmask 257026
      %248 = vst.msk [vmem:[#allocation2 + $0x8] sm:$0xc] %vm247, %v237
      %v249 = vld [vmem:[%s183] sm:$0x3f]
      %v251 = vcombine.high %v249, %v249
      %v253 = vunpack.c.l.s4 1983009808
      %v254 = vunpack.c.0.s8 %v253
      %v255 = vlaneseq
      %v256 = vshrl.u32 %v255, 7
      %v257 = vsub.s32 %v254, %v256
      %v258 = vrot.slane %v249, %v257
      %v260 = vunpack.c.l.s4 1983009808
      %v261 = vunpack.c.0.s8 %v260
      %v262 = vlaneseq
      %v263 = vshrl.u32 %v262, 7
      %v264 = vsub.s32 %v261, %v263
      %v265 = vrot.slane %v251, %v264
      %266 = vrot.lane.b32.xlu0 %v258, 126
      %v267 = vpop.permute.xlu0 %266
      %268 = vrot.lane.b32.xlu0 %v265, 126
      %v269 = vpop.permute.xlu0 %268
      %v270 = vrot.slane %v267, 4
      %v271 = vrot.slane %v269, 4
      %v272 = vsel %vm240, %v270, %v271
      %vm273 = vcmask 1031168
      %v274 = vsel %vm273, %v267, %v272
      %277 = vst [vmem:[#allocation2 + $0xc] sm:$0x33] %v274
      %278 = vst.msk [vmem:[#allocation2 + $0x14] sm:$0x3] %vm215, %v269
      %v279 = vld [vmem:[%s183] sm:$0x3f]
      %v281 = vcombine.low %v279, %v279
      %v283 = vunpack.c.l.s4 1983009808
      %v284 = vunpack.c.0.s8 %v283
      %v285 = vlaneseq
      %v286 = vshrl.u32 %v285, 7
      %v287 = vsub.s32 %v284, %v286
      %v288 = vrot.slane %v281, %v287
      %v290 = vunpack.c.l.s4 1983009808
      %v291 = vunpack.c.0.s8 %v290
      %v292 = vlaneseq
      %v293 = vshrl.u32 %v292, 7
      %v294 = vsub.s32 %v291, %v293
      %v295 = vrot.slane %v279, %v294
      %296 = vrot.lane.b32.xlu0 %v288, 110
      %v297 = vpop.permute.xlu0 %296
      %298 = vrot.lane.b32.xlu0 %v295, 110
      %v299 = vpop.permute.xlu0 %298
      %v300 = vrot.slane %v297, 4
      %v301 = vrot.slane %v299, 4
      %v302 = vsel %vm240, %v300, %v301
      %vm303 = vcmask 900096
      %v304 = vsel %vm303, %v297, %v302
      %307 = vst [vmem:[#allocation2 + $0xc] sm:$0xcc] %v304
      %308 = vst.msk [vmem:[#allocation2 + $0x14] sm:$0xc] %vm247, %v299
      %v309 = vld [vmem:[%s183] sm:$0x3f]
      %v311 = vcombine.high %v309, %v309
      %v313 = vunpack.c.l.s4 1983009808
      %v314 = vunpack.c.0.s8 %v313
      %v315 = vlaneseq
      %v316 = vshrl.u32 %v315, 7
      %v317 = vsub.s32 %v314, %v316
      %v318 = vrot.slane %v309, %v317
      %v320 = vunpack.c.l.s4 1983009808
      %v321 = vunpack.c.0.s8 %v320
      %v322 = vlaneseq
      %v323 = vshrl.u32 %v322, 7
      %v324 = vsub.s32 %v321, %v323
      %v325 = vrot.slane %v311, %v324
      %326 = vrot.lane.b32.xlu0 %v318, 109
      %v327 = vpop.permute.xlu0 %326
      %328 = vrot.lane.b32.xlu0 %v325, 109
      %v329 = vpop.permute.xlu0 %328
      %v330 = vrot.slane %v327, 4
      %v331 = vrot.slane %v329, 4
      %v332 = vsel %vm240, %v330, %v331
      %vm333 = vcmask 891904
      %v334 = vsel %vm333, %v327, %v332
      %337 = vst [vmem:[#allocation2 + $0x18] sm:$0x33] %v334
      %338 = vst.msk [vmem:[#allocation2 + $0x20] sm:$0x3] %vm215, %v329
      %v339 = vld [vmem:[%s183] sm:$0x3f]
      %v341 = vcombine.low %v339, %v339
      %v343 = vunpack.c.l.s4 1983009808
      %v344 = vunpack.c.0.s8 %v343
      %v345 = vlaneseq
      %v346 = vshrl.u32 %v345, 7
      %v347 = vsub.s32 %v344, %v346
      %v348 = vrot.slane %v341, %v347
      %v350 = vunpack.c.l.s4 1983009808
      %v351 = vunpack.c.0.s8 %v350
      %v352 = vlaneseq
      %v353 = vshrl.u32 %v352, 7
      %v354 = vsub.s32 %v351, %v353
      %v355 = vrot.slane %v339, %v354
      %356 = vrot.lane.b32.xlu0 %v348, 108
      %v357 = vpop.permute.xlu0 %356
      %358 = vrot.lane.b32.xlu0 %v355, 108
      %v359 = vpop.permute.xlu0 %358
      %v360 = vrot.slane %v357, 4
      %v361 = vrot.slane %v359, 4
      %v362 = vsel %vm240, %v360, %v361
      %vm363 = vcmask 883712
      %v364 = vsel %vm363, %v357, %v362
      %367 = vst [vmem:[#allocation2 + $0x18] sm:$0xcc] %v364
      %368 = vst.msk [vmem:[#allocation2 + $0x20] sm:$0xc] %vm247, %v359
      %v369 = vld [vmem:[%s183] sm:$0x3f]
      %v371 = vcombine.high %v369, %v369
      %v373 = vunpack.c.l.s4 1983009808
      %v374 = vunpack.c.0.s8 %v373
      %v375 = vlaneseq
      %v376 = vshrl.u32 %v375, 7
      %v377 = vsub.s32 %v374, %v376
      %v378 = vrot.slane %v369, %v377
      %v380 = vunpack.c.l.s4 1983009808
      %v381 = vunpack.c.0.s8 %v380
      %v382 = vlaneseq
      %v383 = vshrl.u32 %v382, 7
      %v384 = vsub.s32 %v381, %v383
      %v385 = vrot.slane %v371, %v384
      %386 = vrot.lane.b32.xlu0 %v378, 92
      %v387 = vpop.permute.xlu0 %386
      %388 = vrot.lane.b32.xlu0 %v385, 92
      %v389 = vpop.permute.xlu0 %388
      %v390 = vrot.slane %v387, 4
      %v391 = vrot.slane %v389, 4
      %v392 = vsel %vm240, %v390, %v391
      %vm393 = vcmask 752640
      %v394 = vsel %vm393, %v387, %v392
      %397 = vst [vmem:[#allocation2 + $0x24] sm:$0x33] %v394
      %398 = vst.msk [vmem:[#allocation2 + $0x2c] sm:$0x3] %vm215, %v389
      %v399 = vld [vmem:[%s183] sm:$0x3f]
      %v401 = vcombine.low %v399, %v399
      %v403 = vunpack.c.l.s4 1983009808
      %v404 = vunpack.c.0.s8 %v403
      %v405 = vlaneseq
      %v406 = vshrl.u32 %v405, 7
      %v407 = vsub.s32 %v404, %v406
      %v408 = vrot.slane %v401, %v407
      %v410 = vunpack.c.l.s4 1983009808
      %v411 = vunpack.c.0.s8 %v410
      %v412 = vlaneseq
      %v413 = vshrl.u32 %v412, 7
      %v414 = vsub.s32 %v411, %v413
      %v415 = vrot.slane %v399, %v414
      %416 = vrot.lane.b32.xlu0 %v408, 91
      %v417 = vpop.permute.xlu0 %416
      %418 = vrot.lane.b32.xlu0 %v415, 91
      %v419 = vpop.permute.xlu0 %418
      %v420 = vrot.slane %v417, 4
      %v421 = vrot.slane %v419, 4
      %v422 = vsel %vm240, %v420, %v421
      %vm423 = vcmask 744448
      %v424 = vsel %vm423, %v417, %v422
      %427 = vst [vmem:[#allocation2 + $0x24] sm:$0xcc] %v424
      %428 = vst.msk [vmem:[#allocation2 + $0x2c] sm:$0xc] %vm247, %v419
      %v429 = vld [vmem:[%s183] sm:$0x3f]
      %v431 = vcombine.high %v429, %v429
      %v433 = vunpack.c.l.s4 1983009808
      %v434 = vunpack.c.0.s8 %v433
      %v435 = vlaneseq
      %v436 = vshrl.u32 %v435, 7
      %v437 = vsub.s32 %v434, %v436
      %v438 = vrot.slane %v429, %v437
      %v440 = vunpack.c.l.s4 1983009808
      %v441 = vunpack.c.0.s8 %v440
      %v442 = vlaneseq
      %v443 = vshrl.u32 %v442, 7
      %v444 = vsub.s32 %v441, %v443
      %v445 = vrot.slane %v431, %v444
      %446 = vrot.lane.b32.xlu0 %v438, 90
      %v447 = vpop.permute.xlu0 %446
      %448 = vrot.lane.b32.xlu0 %v445, 90
      %v449 = vpop.permute.xlu0 %448
      %v450 = vrot.slane %v447, 4
      %v451 = vrot.slane %v449, 4
      %v452 = vsel %vm240, %v450, %v451
      %vm453 = vcmask 736256
      %v454 = vsel %vm453, %v447, %v452
      %457 = vst [vmem:[#allocation2 + $0x30] sm:$0x33] %v454
      %458 = vst.msk [vmem:[#allocation2 + $0x38] sm:$0x3] %vm215, %v449
      %v459 = vld [vmem:[%s1] sm:$0xf]
      %v460 = vld [vmem:[%s1 + $0x4] sm:$0xf]
      %v461 = vld [vmem:[%s1 + $0x8] sm:$0xf]
      %v462 = vld [vmem:[%s1 + $0xc] sm:$0xf]
      %v463 = vld [vmem:[#allocation2] sm:$0xff]
      %v464 = vld [vmem:[#allocation2 + $0x8] sm:$0xf]
      %v465 = vld [vmem:[#allocation2 + $0xc] sm:$0xff]
      %v466 = vld [vmem:[#allocation2 + $0x14] sm:$0xf]
      %v467 = vld [vmem:[#allocation2 + $0x18] sm:$0xff]
      %v468 = vld [vmem:[#allocation2 + $0x20] sm:$0xf]
      %v469 = vld [vmem:[#allocation2 + $0x24] sm:$0xff]
      %v470 = vld [vmem:[#allocation2 + $0x2c] sm:$0xf]
      %v471 = vld [vmem:[#allocation2 + $0x30] sm:$0x33]
      %v472 = vld [vmem:[#allocation2 + $0x38] sm:$0x3]
      %v473 = vld [vmem:[%s2] sm:$0xff]
      %v474 = vld [vmem:[%s2 + $0x8] sm:$0xff]
      %v475 = vld [vmem:[%s2 + $0x10] sm:$0xff]
      %v476 = vld [vmem:[%s2 + $0x18] sm:$0xff]
      %478 = vset.pattern.permute.xlu0 0
      %479 = vperm.xlu0 %478, %v473
      %v480 = vpop.permute.xlu0 %479
      %483 = vset.pattern.permute.xlu0 0
      %484 = vperm.xlu0 %483, %v474
      %v485 = vpop.permute.xlu0 %484
      %488 = vset.pattern.permute.xlu0 0
      %489 = vperm.xlu0 %488, %v475
      %v490 = vpop.permute.xlu0 %489
      %493 = vset.pattern.permute.xlu0 0
      %494 = vperm.xlu0 %493, %v476
      %v495 = vpop.permute.xlu0 %494
      %v501 = vunpack.c.l.b16 %v459
      %v502 = vunpack.c.l.b16 %v460
      %v503 = vunpack.c.l.b16 %v461
      %v504 = vunpack.c.l.b16 %v462
      %v505 = vpack.c.b16 %v502, %v501
      %v506 = vpack.c.b16 %v504, %v503
      %v517 = vunpack.c.l.b16 %v463
      %v518 = vunpack.c.h.b16 %v463
      %v519 = vunpack.c.l.b16 %v464
      %v520 = vunpack.c.l.b16 %v465
      %v521 = vunpack.c.h.b16 %v465
      %v522 = vunpack.c.l.b16 %v466
      %v523 = vunpack.c.l.b16 %v467
      %v524 = vunpack.c.h.b16 %v467
      %v525 = vunpack.c.l.b16 %v468
      %v526 = vunpack.c.l.b16 %v469
      %v527 = vunpack.c.h.b16 %v469
      %v528 = vunpack.c.l.b16 %v470
      %v529 = vunpack.c.l.b16 %v471
      %v530 = vunpack.c.h.b16 %v471
      %v531 = vunpack.c.l.b16 %v472
      %v532 = vpack.c.b16 %v520, %v517
      %v533 = vpack.c.b16 %v521, %v518
      %v534 = vpack.c.b16 %v522, %v519
      %v535 = vpack.c.b16 %v526, %v523
      %v536 = vpack.c.b16 %v527, %v524
      %v537 = vpack.c.b16 %v528, %v525
      %v538 = vpack.c.b16 %v529, %v529
      %v539 = vpack.c.b16 %v530, %v530
      %v540 = vpack.c.b16 %v531, %v531
      %vm547 = vcmask 293888
      %v549 = vsel %vm547, %v505, 0
      %v552 = vsel %vm547, %v506, 0
      %vm554 = vcmask 1041408
      %v556 = vsel %vm554, %v538, 0
      %v559 = vsel %vm554, %v539, 0
      %v562 = vsel %vm554, %v540, 0
      %564 = vmatprep.subr.bf16.mxu0 0
      %565 = vmatpush1.bf16.msra.mxu0 0
      %566 = vmatprep.subr.bf16.mxu0 0
      %567 = vmatpush1.bf16.msra.mxu0 0
      %568 = vmatprep.subr.bf16.mxu0 0
      %569 = vmatpush1.bf16.msra.mxu0 0
      %570 = vmatprep.subr.bf16.mxu0 0
      %571 = vmatpush1.bf16.msra.mxu0 0
      %572 = vmatprep.subr.bf16.mxu0 0
      %573 = vmatpush1.bf16.msra.mxu0 0
      %574 = vmatprep.subr.bf16.mxu0 %v559
      %575 = vmatpush1.bf16.msra.mxu0 %v556
      %576 = vmatprep.subr.bf16.mxu0 %v536
      %577 = vmatpush1.bf16.msra.mxu0 %v535
      %578 = vmatprep.subr.bf16.mxu0 %v533
      %579 = vmatpush1.bf16.msra.mxu0 %v532
      %580 = vmatprep.subr.bf16.mxu0 0
      %581 = vmatpush2.bf16.msra.mxu0 0
      %582 = vmatprep.subr.bf16.mxu0 0
      %583 = vmatpush2.bf16.msra.mxu0 0
      %584 = vmatprep.subr.bf16.mxu0 0
      %585 = vmatpush2.bf16.msra.mxu0 0
      %586 = vmatprep.subr.bf16.mxu0 0
      %587 = vmatpush2.bf16.msra.mxu0 0
      %588 = vmatprep.subr.bf16.mxu0 0
      %589 = vmatpush2.bf16.msra.mxu0 0
      %590 = vmatprep.subr.bf16.mxu0 0
      %591 = vmatpush2.bf16.msra.mxu0 0
      %592 = vmatprep.subr.bf16.mxu0 0
      %593 = vmatpush2.bf16.msra.mxu0 0
      %594 = vmatprep.subr.bf16.mxu0 0
      %595 = vmatpush2.bf16.msra.mxu0 0
      %596 = vmatprep.mubr.bf16.mxu0 0
      %597 = vmatmul.mubr.bf16.gmra.mxu0 %v549
      %v598 = vpop.f32.mrf.mxu0
      %v599 = vadd.f32 %v480, %v598
      %v600 = vpop.f32.mrf.mxu0
      %v601 = vadd.f32 %v480, %v600
      %v602 = vpop.f32.mrf.mxu0
      %v603 = vadd.f32 %v485, %v602
      %v604 = vpop.f32.mrf.mxu0
      %v605 = vadd.f32 %v485, %v604
      %606 = vmatprep.mubr.bf16.mxu0 0
      %607 = vmatmul.mubr.bf16.gmra.mxu0 %v552
      %v608 = vpop.f32.mrf.mxu0
      %v609 = vadd.f32 %v490, %v608
      %v610 = vpop.f32.mrf.mxu0
      %v611 = vadd.f32 %v490, %v610
      %v612 = vpop.f32.mrf.mxu0
      %v613 = vadd.f32 %v495, %v612
      %v614 = vpop.f32.mrf.mxu0
      %v615 = vadd.f32 %v495, %v614
      %616 = vdwg.mxu0
      %617 = vmatprep.subr.bf16.mxu0 0
      %618 = vmatpush1.bf16.msra.mxu0 0
      %619 = vmatprep.subr.bf16.mxu0 0
      %620 = vmatpush1.bf16.msra.mxu0 0
      %621 = vmatprep.subr.bf16.mxu0 0
      %622 = vmatpush1.bf16.msra.mxu0 0
      %623 = vmatprep.subr.bf16.mxu0 0
      %624 = vmatpush1.bf16.msra.mxu0 0
      %625 = vmatprep.subr.bf16.mxu0 0
      %626 = vmatpush1.bf16.msra.mxu0 0
      %627 = vmatprep.subr.bf16.mxu0 0
      %628 = vmatpush1.bf16.msra.mxu0 %v562
      %629 = vmatprep.subr.bf16.mxu0 0
      %630 = vmatpush1.bf16.msra.mxu0 %v537
      %631 = vmatprep.subr.bf16.mxu0 0
      %632 = vmatpush1.bf16.msra.mxu0 %v534
      %633 = vmatprep.subr.bf16.mxu0 0
      %634 = vmatpush2.bf16.msra.mxu0 0
      %635 = vmatprep.subr.bf16.mxu0 0
      %636 = vmatpush2.bf16.msra.mxu0 0
      %637 = vmatprep.subr.bf16.mxu0 0
      %638 = vmatpush2.bf16.msra.mxu0 0
      %639 = vmatprep.subr.bf16.mxu0 0
      %640 = vmatpush2.bf16.msra.mxu0 0
      %641 = vmatprep.subr.bf16.mxu0 0
      %642 = vmatpush2.bf16.msra.mxu0 0
      %643 = vmatprep.subr.bf16.mxu0 0
      %644 = vmatpush2.bf16.msra.mxu0 0
      %645 = vmatprep.subr.bf16.mxu0 0
      %646 = vmatpush2.bf16.msra.mxu0 0
      %647 = vmatprep.subr.bf16.mxu0 0
      %648 = vmatpush2.bf16.msra.mxu0 0
      %649 = vmatprep.mubr.bf16.mxu0 0
      %650 = vmatmul.mubr.bf16.gmra.mxu0 %v549
      %v651 = vpop.f32.mrf.mxu0
      %v652 = vadd.f32 %v480, %v651
      %v653 = vpop.f32.mrf.mxu0
      %v654 = vpop.f32.mrf.mxu0
      %v655 = vadd.f32 %v485, %v654
      %v656 = vpop.f32.mrf.mxu0
      %657 = vmatprep.mubr.bf16.mxu0 0
      %658 = vmatmul.mubr.bf16.gmra.mxu0 %v552
      %v659 = vpop.f32.mrf.mxu0
      %v660 = vadd.f32 %v490, %v659
      %v661 = vpop.f32.mrf.mxu0
      %v662 = vpop.f32.mrf.mxu0
      %v663 = vadd.f32 %v495, %v662
      %v664 = vpop.f32.mrf.mxu0
      %665 = vdwg.mxu0
      %v666 = vpack.c.bf16 %v603, %v599
      %v667 = vpack.c.bf16 %v605, %v601
      %v668 = vpack.c.bf16 %v655, %v652
      %v669 = vpack.c.bf16 %v613, %v609
      %v670 = vpack.c.bf16 %v615, %v611
      %v671 = vpack.c.bf16 %v663, %v660
      %v678 = vunpack.c.l.b16 %v666
      %v679 = vunpack.c.l.b16 %v667
      %v680 = vunpack.c.l.b16 %v668
      %v681 = vunpack.c.h.b16 %v666
      %v682 = vunpack.c.h.b16 %v667
      %v683 = vunpack.c.h.b16 %v668
      %v684 = vunpack.c.l.b16 %v669
      %v685 = vunpack.c.l.b16 %v670
      %v686 = vunpack.c.l.b16 %v671
      %v687 = vunpack.c.h.b16 %v669
      %v688 = vunpack.c.h.b16 %v670
      %v689 = vunpack.c.h.b16 %v671
      %v690 = vpack.c.b16 %v679, %v678
      %v691 = vpack.c.b16 %v680, %v680
      %v692 = vpack.c.b16 %v682, %v681
      %v693 = vpack.c.b16 %v683, %v683
      %v694 = vpack.c.b16 %v685, %v684
      %v695 = vpack.c.b16 %v686, %v686
      %v696 = vpack.c.b16 %v688, %v687
      %v697 = vpack.c.b16 %v689, %v689
      %706 = vst [vmem:[%s192] sm:$0xff] %v690
      %vm707 = vcmask 257024
      %708 = vst.msk [vmem:[%s192 + $0x8] sm:$0xf] %vm707, %v691
      %709 = vst [vmem:[%s192 + $0xc] sm:$0xff] %v692
      %710 = vst.msk [vmem:[%s192 + $0x14] sm:$0xf] %vm707, %v693
      %711 = vst [vmem:[%s192 + $0x18] sm:$0xff] %v694
      %712 = vst.msk [vmem:[%s192 + $0x20] sm:$0xf] %vm707, %v695
      %713 = vst [vmem:[%s192 + $0x24] sm:$0xff] %v696
      %714 = vst.msk [vmem:[%s192 + $0x2c] sm:$0xf] %vm707, %v697
      %s715 = smul.u32 3, %s19
      %p716 = scmp.lt.s32.totalorder %s18, 1
      %s717 = scalar_select %p716, %s18, 1
      %p718 = scmp.lt.s32.totalorder %s715, 2
      %s719 = scalar_select %p718, %s715, 2
      %s720 = smul.addr %s717, 12
      %s721 = sadd.s32 %s719, %s720
      %s722 = smul.addr %s721, 4
      %s723 = scalar_lea.vmem %s3, %s722
      // Predicated region
      $region33: #{upsample_conv2d_forward.1} parent=31 // pred_check
        %p724 = pneg %p114
      $region34: #{upsample_conv2d_forward.1} parent=31 // pred_check_branch
        %726 = sbr.rel (%p724) target = $region36
      $region35: #{upsample_conv2d_forward.1} parent=31 // pred_region
        %s727 = smul.u32 3, %s19
      $region36: #{upsample_conv2d_forward.1} parent=31 // pred_fallthru
        _
    $region32: #{upsample_conv2d_forward.1} parent=5 // pred_fallthru
      _
    %p728 = scmp.le.s32.totalorder 2, %s9
    // Predicated region
    $region37: #{upsample_conv2d_forward.1} parent=5 // pred_check
      %p729 = pneg %p728
    $region38: #{upsample_conv2d_forward.1} parent=5 // pred_check_branch
      %731 = sbr.rel (%p729) target = $region40
    $region39: #{upsample_conv2d_forward.1} parent=5 // pred_region
      %s732 = ssub.s32 %s9, 2
      // Predicated region
      $region41: #{upsample_conv2d_forward.1} parent=39 // pred_check
        %p733 = pneg %p120
      $region42: #{upsample_conv2d_forward.1} parent=39 // pred_check_branch
        %735 = sbr.rel (%p733) target = $region44
      $region43: #{upsample_conv2d_forward.1} parent=39 // pred_region
        %s736 = smul.u32 3, %s21
        %p737 = scmp.lt.s32.totalorder %s20, 1
        %s738 = scalar_select %p737, %s20, 1
        %p739 = scmp.lt.s32.totalorder %s736, 2
        %s740 = scalar_select %p739, %s736, 2
        %s741 = smul.addr %s738, 12
        %s742 = sadd.s32 %s740, %s741
        %s743 = smul.addr %s742, 4
        %s744 = scalar_lea.vmem %s3, %s743
      $region44: #{upsample_conv2d_forward.1} parent=39 // pred_fallthru
        _
    $region40: #{upsample_conv2d_forward.1} parent=5 // pred_fallthru
      _
  $region6: #{upsample_conv2d_forward.1} parent=0 // loop_footer
    %s13 = sadd.s32 1, %s9
  $region7: #{upsample_conv2d_forward.1} parent=0 // loop_footer_branch
    %8 = sbr.rel target = $region3
  $region8: #{upsample_conv2d_forward.1} parent=0 // loop_exit
    _

</llo_original>
